<compile_context>
chip_gen: v7x
topology: tpu7x:2x2x1
jax: 0.10.0
libtpu: 0.0.40
codegen_flags: <defaults>
</compile_context>

<pallas_src>
import jax
import jax.numpy as jnp
from jax.experimental import pallas as pl
from jax.experimental.pallas import tpu as pltpu

EPS = 1e-5


def add_layernorm_kernel(x_ref, y_ref, gamma_ref, beta_ref, o_ref):
    # x_ref, y_ref: (R_pad, C) blocks in native dtype; gamma/beta: (1, C).
    s = x_ref[...].astype(jnp.float32) + y_ref[...].astype(jnp.float32)

    inv_c = jnp.float32(1.0 / s.shape[-1])            # compile-time constant
    mean = jnp.sum(s, axis=-1, keepdims=True) * inv_c  # E[s]
    mean_sq = jnp.sum(s * s, axis=-1, keepdims=True) * inv_c  # E[s^2]
    var = mean_sq - mean * mean                        # biased variance (torch LN)

    inv = jax.lax.rsqrt(var + EPS)                     # EUP slot
    normed = (s - mean) * inv

    gamma = gamma_ref[...].astype(jnp.float32)
    beta = beta_ref[...].astype(jnp.float32)
    o_ref[...] = (normed * gamma + beta).astype(o_ref.dtype)


def add_layernorm(x, y, gamma, beta):
    """x, y: [..., C]; gamma, beta: [C]. Returns LayerNorm(x + y) over C."""
    orig_shape = x.shape
    C = orig_shape[-1]
    R = 1
    for d in orig_shape[:-1]:
        R *= d

    # Pad row count up to a multiple of 8 so the sublane axis is dense.
    R_pad = ((R + 7) // 8) * 8

    x2 = x.reshape(R, C)
    y2 = y.reshape(R, C)
    if R_pad != R:
        pad = ((0, R_pad - R), (0, 0))
        x2 = jnp.pad(x2, pad)
        y2 = jnp.pad(y2, pad)

    g2 = gamma.reshape(1, C)
    b2 = beta.reshape(1, C)

    out = pl.pallas_call(
        add_layernorm_kernel,
        out_shape=jax.ShapeDtypeStruct((R_pad, C), x.dtype),
        in_specs=[
            pl.BlockSpec(memory_space=pltpu.MemorySpace.VMEM),
            pl.BlockSpec(memory_space=pltpu.MemorySpace.VMEM),
            pl.BlockSpec(memory_space=pltpu.MemorySpace.VMEM),
            pl.BlockSpec(memory_space=pltpu.MemorySpace.VMEM),
        ],
        out_specs=pl.BlockSpec(memory_space=pltpu.MemorySpace.VMEM),
    )(x2, y2, g2, b2)

    return out[:R].reshape(orig_shape)


if __name__ == "__main__":
    key = jax.random.PRNGKey(0)
    k1, k2 = jax.random.split(key)

    # Shapes match the PyTorch module: [1, 7, 7, 768]
    x556 = jax.random.normal(k1, (1, 7, 7, 768), dtype=jnp.float32)
    x570 = jax.random.normal(k2, (1, 7, 7, 768), dtype=jnp.float32)

    # nn.LayerNorm default init: weight = ones, bias = zeros
    gamma = jnp.ones((768,), dtype=jnp.float32)
    beta = jnp.zeros((768,), dtype=jnp.float32)

    out = add_layernorm(x556, x570, gamma, beta)
    jax.block_until_ready(out)

    # Sanity check against pure-JAX (two-pass) reference
    s = x556 + x570
    mean = jnp.mean(s, axis=-1, keepdims=True)
    var = jnp.mean((s - mean) ** 2, axis=-1, keepdims=True)
    ref = (s - mean) / jnp.sqrt(var + EPS) * gamma + beta
    assert jnp.allclose(out, ref, atol=1e-4, rtol=1e-5), "mismatch vs reference"

    print("KERNEL_OK")
</pallas_src>

<mosaic_0001>
module attributes {stable_mosaic.version = 11 : i64} {
  func.func @add_layernorm_kernel(%arg0: memref<56x768xf32, #tpu.memory_space<vmem>>, %arg1: memref<56x768xf32, #tpu.memory_space<vmem>>, %arg2: memref<1x768xf32, #tpu.memory_space<vmem>>, %arg3: memref<1x768xf32, #tpu.memory_space<vmem>>, %arg4: memref<56x768xf32, #tpu.memory_space<vmem>>) attributes {dimension_semantics = [], scalar_prefetch = 0 : i64, scratch_operands = 0 : i64, tpu.core_type = #tpu.core_type<tc>} {
    %c0 = arith.constant 0 : index
    %c0_0 = arith.constant 0 : index
    %0 = vector.load %arg0[%c0, %c0_0] : memref<56x768xf32, #tpu.memory_space<vmem>>, vector<56x768xf32>
    %c0_1 = arith.constant 0 : index
    %c0_2 = arith.constant 0 : index
    %1 = vector.load %arg1[%c0_1, %c0_2] : memref<56x768xf32, #tpu.memory_space<vmem>>, vector<56x768xf32>
    %2 = arith.addf %0, %1 : vector<56x768xf32>
    %cst = arith.constant dense<0.000000e+00> : vector<56xf32>
    %3 = vector.multi_reduction <add>, %2, %cst [1] : vector<56x768xf32> to vector<56xf32>
    %4 = vector.shape_cast %3 : vector<56xf32> to vector<56x1xf32>
    %cst_3 = arith.constant 0.00130208337 : f32
    %5 = vector.broadcast %cst_3 : f32 to vector<56x1xf32>
    %6 = arith.mulf %4, %5 : vector<56x1xf32>
    %7 = arith.mulf %2, %2 : vector<56x768xf32>
    %cst_4 = arith.constant dense<0.000000e+00> : vector<56xf32>
    %8 = vector.multi_reduction <add>, %7, %cst_4 [1] : vector<56x768xf32> to vector<56xf32>
    %9 = vector.shape_cast %8 : vector<56xf32> to vector<56x1xf32>
    %cst_5 = arith.constant 0.00130208337 : f32
    %10 = vector.broadcast %cst_5 : f32 to vector<56x1xf32>
    %11 = arith.mulf %9, %10 : vector<56x1xf32>
    %12 = arith.mulf %6, %6 : vector<56x1xf32>
    %13 = arith.subf %11, %12 : vector<56x1xf32>
    %cst_6 = arith.constant 9.99999974E-6 : f32
    %14 = vector.broadcast %cst_6 : f32 to vector<56x1xf32>
    %15 = arith.addf %13, %14 : vector<56x1xf32>
    %16 = math.rsqrt %15 : vector<56x1xf32>
    %17 = vector.broadcast %6 : vector<56x1xf32> to vector<56x768xf32>
    %18 = arith.subf %2, %17 : vector<56x768xf32>
    %19 = vector.broadcast %16 : vector<56x1xf32> to vector<56x768xf32>
    %20 = arith.mulf %18, %19 : vector<56x768xf32>
    %c0_7 = arith.constant 0 : index
    %c0_8 = arith.constant 0 : index
    %21 = vector.load %arg2[%c0_7, %c0_8] : memref<1x768xf32, #tpu.memory_space<vmem>>, vector<1x768xf32>
    %c0_9 = arith.constant 0 : index
    %c0_10 = arith.constant 0 : index
    %22 = vector.load %arg3[%c0_9, %c0_10] : memref<1x768xf32, #tpu.memory_space<vmem>>, vector<1x768xf32>
    %23 = vector.broadcast %21 : vector<1x768xf32> to vector<56x768xf32>
    %24 = arith.mulf %20, %23 : vector<56x768xf32>
    %25 = vector.broadcast %22 : vector<1x768xf32> to vector<56x768xf32>
    %26 = arith.addf %24, %25 : vector<56x768xf32>
    %c0_11 = arith.constant 0 : index
    %c0_12 = arith.constant 0 : index
    %27 = vector.load %arg4[%c0_11, %c0_12] : memref<56x768xf32, #tpu.memory_space<vmem>>, vector<56x768xf32>
    tpu.vector_store %arg4[%c0_11, %c0_12], %26 {strides = array<i32>} : memref<56x768xf32, #tpu.memory_space<vmem>>, vector<56x768xf32>,
    return
  }
}

</mosaic_0001>

<llo_original>
// kernel: tpu_custom_call.1
$region0: #{tpu_custom_call.1}
  #allocation0 [shape = 'u32[]', space=smem, size = 0x4, offset = 0x4, fixed_abs, tag = 'smem constant byte address 0x4 - core index']
  #allocation1 [shape = 'u32[144,128]{1,0:T(1,128)}', space=vmem, size = 0x12000, scoped, tag = 'internal scratch']
  %s0 = inlined_call_operand.hbm [shape: f32[56,768], index: 0, kind: input, shape index: {}]
  %s1 = inlined_call_operand.hbm [shape: f32[56,768], index: 1, kind: input, shape index: {}]
  %s2 = inlined_call_operand.vmem [shape: f32[1,768], index: 2, kind: input, shape index: {}]
  %s3 = inlined_call_operand.hbm [shape: f32[1,768], index: 3, kind: input, shape index: {}]
  %s4 = inlined_call_operand.hbm [shape: f32[56,768], index: 4, kind: output, shape index: {}]
  %s5 = sld [smem:[#allocation0]]
  $region38: #{tpu_custom_call.1} parent=0
    _
  %s7 = ssub.s32 1, %s5
  %s8 = scalar_select 0, %s7, %s5
  $region1: #{tpu_custom_call.1} parent=0
    #allocation2 [shape = 'u8[172032]{0}', space=vmem, size = 0x2a000, scoped, tag = 'input window, operand 0, single buffered']
    #allocation3 [shape = 's32[1]{0}', space=sflag, size = 0x4, scoped, tag = 'scoped memory for tpu_custom_call.1']
    #allocation4 [shape = 's32[1]{0}', space=sflag, size = 0x4, scoped, tag = 'scoped memory for tpu_custom_call.1']
    #allocation5 [shape = 'u8[172032]{0}', space=vmem, size = 0x2a000, scoped, tag = 'input window, operand 1, single buffered']
    #allocation6 [shape = 's32[1]{0}', space=sflag, size = 0x4, scoped, tag = 'scoped memory for tpu_custom_call.1']
    #allocation7 [shape = 'u8[3072]{0}', space=vmem, size = 0xc00, scoped, tag = 'input window, operand 3, single buffered']
    #allocation8 [shape = 'u8[172032]{0}', space=vmem, size = 0x2a000, scoped, tag = 'output window, operand 0, single buffered']
    %9 = vsyncpa [#allocation3], 0
    %10 = vsyncpa [#allocation6], 0
    %11 = vsyncpa [#allocation4], 0
    // Predicated region
    $region2: #{tpu_custom_call.1} parent=1 // pred_check
      _
    $region3: #{tpu_custom_call.1} parent=1 // pred_check_branch
      %13 = sbr.rel (0) target = $region5
    $region4: #{tpu_custom_call.1} parent=1 // pred_region
      %s15 = ssub.s32 5376, 5376
      %16 = vsyncadd [#allocation3], %s15
      %s17 = sshll.u32 [#allocation2], 4
      %s18 = int_to_ptr.vmem [resolvable:$true] %s17
      %23 = dma.hbm_to_vmem [thread:$0]  %s0, 5376, %s18, [#allocation3], 768, 768, 48
    $region5: #{tpu_custom_call.1} parent=1 // pred_fallthru
      _
    // Predicated region
    $region6: #{tpu_custom_call.1} parent=1 // pred_check
      _
    $region7: #{tpu_custom_call.1} parent=1 // pred_check_branch
      %25 = sbr.rel (0) target = $region9
    $region8: #{tpu_custom_call.1} parent=1 // pred_region
      %s27 = ssub.s32 5376, 5376
      %28 = vsyncadd [#allocation6], %s27
      %s29 = sshll.u32 [#allocation5], 4
      %s30 = int_to_ptr.vmem [resolvable:$true] %s29
      %35 = dma.hbm_to_vmem [thread:$0]  %s1, 5376, %s30, [#allocation6], 768, 768, 48
    $region9: #{tpu_custom_call.1} parent=1 // pred_fallthru
      _
    // Predicated region
    $region10: #{tpu_custom_call.1} parent=1 // pred_check
      _
    $region11: #{tpu_custom_call.1} parent=1 // pred_check_branch
      %37 = sbr.rel (0) target = $region13
    $region12: #{tpu_custom_call.1} parent=1 // pred_region
      _
    $region13: #{tpu_custom_call.1} parent=1 // pred_fallthru
      _
    // Predicated region
    $region14: #{tpu_custom_call.1} parent=1 // pred_check
      _
    $region15: #{tpu_custom_call.1} parent=1 // pred_check_branch
      %39 = sbr.rel (0) target = $region17
    $region16: #{tpu_custom_call.1} parent=1 // pred_region
      %s41 = ssub.s32 96, 96
      %42 = vsyncadd [#allocation6], %s41
      %s44 = sshll.u32 [#allocation7], 4
      %s45 = int_to_ptr.vmem [resolvable:$true] %s44
      %47 = dma.hbm_to_vmem [thread:$0]  %s3, 96, %s45, [#allocation6]
    $region17: #{tpu_custom_call.1} parent=1 // pred_fallthru
      _
    // Predicated region
    $region18: #{tpu_custom_call.1} parent=1 // pred_check
      _
    $region19: #{tpu_custom_call.1} parent=1 // pred_check_branch
      %49 = sbr.rel (0) target = $region21
    $region20: #{tpu_custom_call.1} parent=1 // pred_region
      %50 = dma.done [#allocation3], 5376
    $region21: #{tpu_custom_call.1} parent=1 // pred_fallthru
      _
    // Predicated region
    $region22: #{tpu_custom_call.1} parent=1 // pred_check
      _
    $region23: #{tpu_custom_call.1} parent=1 // pred_check_branch
      %52 = sbr.rel (0) target = $region25
    $region24: #{tpu_custom_call.1} parent=1 // pred_region
      %53 = dma.done [#allocation6], 5376
    $region25: #{tpu_custom_call.1} parent=1 // pred_fallthru
      _
    // Predicated region
    $region26: #{tpu_custom_call.1} parent=1 // pred_check
      _
    $region27: #{tpu_custom_call.1} parent=1 // pred_check_branch
      %55 = sbr.rel (0) target = $region29
    $region28: #{tpu_custom_call.1} parent=1 // pred_region
      %56 = dma.done [#allocation6], 96
    $region29: #{tpu_custom_call.1} parent=1 // pred_fallthru
      _
    %v57 = vld [vmem:[#allocation2] sm:$0xff]
    %v58 = vld [vmem:[#allocation2 + $0x8] sm:$0xff]
    %v59 = vld [vmem:[#allocation2 + $0x10] sm:$0xff]
    %v60 = vld [vmem:[#allocation2 + $0x18] sm:$0xff]
    %v61 = vld [vmem:[#allocation2 + $0x20] sm:$0xff]
    %v62 = vld [vmem:[#allocation2 + $0x28] sm:$0xff]
    %v63 = vld [vmem:[#allocation2 + $0x30] sm:$0xff]
    %v64 = vld [vmem:[#allocation2 + $0x38] sm:$0xff]
    %v65 = vld [vmem:[#allocation2 + $0x40] sm:$0xff]
    %v66 = vld [vmem:[#allocation2 + $0x48] sm:$0xff]
    %v67 = vld [vmem:[#allocation2 + $0x50] sm:$0xff]
    %v68 = vld [vmem:[#allocation2 + $0x58] sm:$0xff]
    %v69 = vld [vmem:[#allocation2 + $0x60] sm:$0xff]
    %v70 = vld [vmem:[#allocation2 + $0x68] sm:$0xff]
    %v71 = vld [vmem:[#allocation2 + $0x70] sm:$0xff]
    %v72 = vld [vmem:[#allocation2 + $0x78] sm:$0xff]
    %v73 = vld [vmem:[#allocation2 + $0x80] sm:$0xff]
    %v74 = vld [vmem:[#allocation2 + $0x88] sm:$0xff]
    %v75 = vld [vmem:[#allocation2 + $0x90] sm:$0xff]
    %v76 = vld [vmem:[#allocation2 + $0x98] sm:$0xff]
    %v77 = vld [vmem:[#allocation2 + $0xa0] sm:$0xff]
    %v78 = vld [vmem:[#allocation2 + $0xa8] sm:$0xff]
    %v79 = vld [vmem:[#allocation2 + $0xb0] sm:$0xff]
    %v80 = vld [vmem:[#allocation2 + $0xb8] sm:$0xff]
    %v81 = vld [vmem:[#allocation2 + $0xc0] sm:$0xff]
    %v82 = vld [vmem:[#allocation2 + $0xc8] sm:$0xff]
    %v83 = vld [vmem:[#allocation2 + $0xd0] sm:$0xff]
    %v84 = vld [vmem:[#allocation2 + $0xd8] sm:$0xff]
    %v85 = vld [vmem:[#allocation2 + $0xe0] sm:$0xff]
    %v86 = vld [vmem:[#allocation2 + $0xe8] sm:$0xff]
    %v87 = vld [vmem:[#allocation2 + $0xf0] sm:$0xff]
    %v88 = vld [vmem:[#allocation2 + $0xf8] sm:$0xff]
    %v89 = vld [vmem:[#allocation2 + $0x100] sm:$0xff]
    %v90 = vld [vmem:[#allocation2 + $0x108] sm:$0xff]
    %v91 = vld [vmem:[#allocation2 + $0x110] sm:$0xff]
    %v92 = vld [vmem:[#allocation2 + $0x118] sm:$0xff]
    %v93 = vld [vmem:[#allocation2 + $0x120] sm:$0xff]
    %v94 = vld [vmem:[#allocation2 + $0x128] sm:$0xff]
    %v95 = vld [vmem:[#allocation2 + $0x130] sm:$0xff]
    %v96 = vld [vmem:[#allocation2 + $0x138] sm:$0xff]
    %v97 = vld [vmem:[#allocation2 + $0x140] sm:$0xff]
    %v98 = vld [vmem:[#allocation2 + $0x148] sm:$0xff]
    %v99 = vld [vmem:[#allocation5] sm:$0xff]
    %v100 = vld [vmem:[#allocation5 + $0x8] sm:$0xff]
    %v101 = vld [vmem:[#allocation5 + $0x10] sm:$0xff]
    %v102 = vld [vmem:[#allocation5 + $0x18] sm:$0xff]
    %v103 = vld [vmem:[#allocation5 + $0x20] sm:$0xff]
    %v104 = vld [vmem:[#allocation5 + $0x28] sm:$0xff]
    %v105 = vld [vmem:[#allocation5 + $0x30] sm:$0xff]
    %v106 = vld [vmem:[#allocation5 + $0x38] sm:$0xff]
    %v107 = vld [vmem:[#allocation5 + $0x40] sm:$0xff]
    %v108 = vld [vmem:[#allocation5 + $0x48] sm:$0xff]
    %v109 = vld [vmem:[#allocation5 + $0x50] sm:$0xff]
    %v110 = vld [vmem:[#allocation5 + $0x58] sm:$0xff]
    %v111 = vld [vmem:[#allocation5 + $0x60] sm:$0xff]
    %v112 = vld [vmem:[#allocation5 + $0x68] sm:$0xff]
    %v113 = vld [vmem:[#allocation5 + $0x70] sm:$0xff]
    %v114 = vld [vmem:[#allocation5 + $0x78] sm:$0xff]
    %v115 = vld [vmem:[#allocation5 + $0x80] sm:$0xff]
    %v116 = vld [vmem:[#allocation5 + $0x88] sm:$0xff]
    %v117 = vld [vmem:[#allocation5 + $0x90] sm:$0xff]
    %v118 = vld [vmem:[#allocation5 + $0x98] sm:$0xff]
    %v119 = vld [vmem:[#allocation5 + $0xa0] sm:$0xff]
    %v120 = vld [vmem:[#allocation5 + $0xa8] sm:$0xff]
    %v121 = vld [vmem:[#allocation5 + $0xb0] sm:$0xff]
    %v122 = vld [vmem:[#allocation5 + $0xb8] sm:$0xff]
    %v123 = vld [vmem:[#allocation5 + $0xc0] sm:$0xff]
    %v124 = vld [vmem:[#allocation5 + $0xc8] sm:$0xff]
    %v125 = vld [vmem:[#allocation5 + $0xd0] sm:$0xff]
    %v126 = vld [vmem:[#allocation5 + $0xd8] sm:$0xff]
    %v127 = vld [vmem:[#allocation5 + $0xe0] sm:$0xff]
    %v128 = vld [vmem:[#allocation5 + $0xe8] sm:$0xff]
    %v129 = vld [vmem:[#allocation5 + $0xf0] sm:$0xff]
    %v130 = vld [vmem:[#allocation5 + $0xf8] sm:$0xff]
    %v131 = vld [vmem:[#allocation5 + $0x100] sm:$0xff]
    %v132 = vld [vmem:[#allocation5 + $0x108] sm:$0xff]
    %v133 = vld [vmem:[#allocation5 + $0x110] sm:$0xff]
    %v134 = vld [vmem:[#allocation5 + $0x118] sm:$0xff]
    %v135 = vld [vmem:[#allocation5 + $0x120] sm:$0xff]
    %v136 = vld [vmem:[#allocation5 + $0x128] sm:$0xff]
    %v137 = vld [vmem:[#allocation5 + $0x130] sm:$0xff]
    %v138 = vld [vmem:[#allocation5 + $0x138] sm:$0xff]
    %v139 = vld [vmem:[#allocation5 + $0x140] sm:$0xff]
    %v140 = vld [vmem:[#allocation5 + $0x148] sm:$0xff]
    %v141 = vadd.f32 %v57, %v99
    %v142 = vadd.f32 %v58, %v100
    %v143 = vadd.f32 %v59, %v101
    %v144 = vadd.f32 %v60, %v102
    %v145 = vadd.f32 %v61, %v103
    %v146 = vadd.f32 %v62, %v104
    %v147 = vadd.f32 %v63, %v105
    %v148 = vadd.f32 %v64, %v106
    %v149 = vadd.f32 %v65, %v107
    %v150 = vadd.f32 %v66, %v108
    %v151 = vadd.f32 %v67, %v109
    %v152 = vadd.f32 %v68, %v110
    %v153 = vadd.f32 %v69, %v111
    %v154 = vadd.f32 %v70, %v112
    %v155 = vadd.f32 %v71, %v113
    %v156 = vadd.f32 %v72, %v114
    %v157 = vadd.f32 %v73, %v115
    %v158 = vadd.f32 %v74, %v116
    %v159 = vadd.f32 %v75, %v117
    %v160 = vadd.f32 %v76, %v118
    %v161 = vadd.f32 %v77, %v119
    %v162 = vadd.f32 %v78, %v120
    %v163 = vadd.f32 %v79, %v121
    %v164 = vadd.f32 %v80, %v122
    %v165 = vadd.f32 %v81, %v123
    %v166 = vadd.f32 %v82, %v124
    %v167 = vadd.f32 %v83, %v125
    %v168 = vadd.f32 %v84, %v126
    %v169 = vadd.f32 %v85, %v127
    %v170 = vadd.f32 %v86, %v128
    %v171 = vadd.f32 %v87, %v129
    %v172 = vadd.f32 %v88, %v130
    %v173 = vadd.f32 %v89, %v131
    %v174 = vadd.f32 %v90, %v132
    %v175 = vadd.f32 %v91, %v133
    %v176 = vadd.f32 %v92, %v134
    %v177 = vadd.f32 %v93, %v135
    %v178 = vadd.f32 %v94, %v136
    %v179 = vadd.f32 %v95, %v137
    %v180 = vadd.f32 %v96, %v138
    %v181 = vadd.f32 %v97, %v139
    %v182 = vadd.f32 %v98, %v140
    %v183 = vadd.f32 %v141, %v142
    %v184 = vadd.f32 %v183, %v143
    %v185 = vadd.f32 %v184, %v144
    %v186 = vadd.f32 %v185, %v145
    %v187 = vadd.f32 %v186, %v146
    %188 = vadd.xlane.f32.xlu0 %v187
    %v189 = vpop.xlane.xlu0 %188
    %v190 = vadd.f32 %v147, %v148
    %v191 = vadd.f32 %v190, %v149
    %v192 = vadd.f32 %v191, %v150
    %v193 = vadd.f32 %v192, %v151
    %v194 = vadd.f32 %v193, %v152
    %195 = vadd.xlane.f32.xlu0 %v194
    %v196 = vpop.xlane.xlu0 %195
    %v197 = vadd.f32 %v153, %v154
    %v198 = vadd.f32 %v197, %v155
    %v199 = vadd.f32 %v198, %v156
    %v200 = vadd.f32 %v199, %v157
    %v201 = vadd.f32 %v200, %v158
    %202 = vadd.xlane.f32.xlu0 %v201
    %v203 = vpop.xlane.xlu0 %202
    %v204 = vadd.f32 %v159, %v160
    %v205 = vadd.f32 %v204, %v161
    %v206 = vadd.f32 %v205, %v162
    %v207 = vadd.f32 %v206, %v163
    %v208 = vadd.f32 %v207, %v164
    %209 = vadd.xlane.f32.xlu0 %v208
    %v210 = vpop.xlane.xlu0 %209
    %v211 = vadd.f32 %v165, %v166
    %v212 = vadd.f32 %v211, %v167
    %v213 = vadd.f32 %v212, %v168
    %v214 = vadd.f32 %v213, %v169
    %v215 = vadd.f32 %v214, %v170
    %216 = vadd.xlane.f32.xlu0 %v215
    %v217 = vpop.xlane.xlu0 %216
    %v218 = vadd.f32 %v171, %v172
    %v219 = vadd.f32 %v218, %v173
    %v220 = vadd.f32 %v219, %v174
    %v221 = vadd.f32 %v220, %v175
    %v222 = vadd.f32 %v221, %v176
    %223 = vadd.xlane.f32.xlu0 %v222
    %v224 = vpop.xlane.xlu0 %223
    %v225 = vadd.f32 %v177, %v178
    %v226 = vadd.f32 %v225, %v179
    %v227 = vadd.f32 %v226, %v180
    %v228 = vadd.f32 %v227, %v181
    %v229 = vadd.f32 %v228, %v182
    %230 = vadd.xlane.f32.xlu0 %v229
    %v231 = vpop.xlane.xlu0 %230
    %v232 = vmul.f32 %v189, 0.0013020834
    %v233 = vmul.f32 %v196, 0.0013020834
    %v234 = vmul.f32 %v203, 0.0013020834
    %v235 = vmul.f32 %v210, 0.0013020834
    %v236 = vmul.f32 %v217, 0.0013020834
    %v237 = vmul.f32 %v224, 0.0013020834
    %v238 = vmul.f32 %v231, 0.0013020834
    %v239 = vmul.f32 %v141, %v141
    %v240 = vmul.f32 %v142, %v142
    %v241 = vmul.f32 %v143, %v143
    %v242 = vmul.f32 %v144, %v144
    %v243 = vmul.f32 %v145, %v145
    %v244 = vmul.f32 %v146, %v146
    %v245 = vmul.f32 %v147, %v147
    %v246 = vmul.f32 %v148, %v148
    %v247 = vmul.f32 %v149, %v149
    %v248 = vmul.f32 %v150, %v150
    %v249 = vmul.f32 %v151, %v151
    %v250 = vmul.f32 %v152, %v152
    %v251 = vmul.f32 %v153, %v153
    %v252 = vmul.f32 %v154, %v154
    %v253 = vmul.f32 %v155, %v155
    %v254 = vmul.f32 %v156, %v156
    %v255 = vmul.f32 %v157, %v157
    %v256 = vmul.f32 %v158, %v158
    %v257 = vmul.f32 %v159, %v159
    %v258 = vmul.f32 %v160, %v160
    %v259 = vmul.f32 %v161, %v161
    %v260 = vmul.f32 %v162, %v162
    %v261 = vmul.f32 %v163, %v163
    %v262 = vmul.f32 %v164, %v164
    %v263 = vmul.f32 %v165, %v165
    %v264 = vmul.f32 %v166, %v166
    %v265 = vmul.f32 %v167, %v167
    %v266 = vmul.f32 %v168, %v168
    %v267 = vmul.f32 %v169, %v169
    %v268 = vmul.f32 %v170, %v170
    %v269 = vmul.f32 %v171, %v171
    %v270 = vmul.f32 %v172, %v172
    %v271 = vmul.f32 %v173, %v173
    %v272 = vmul.f32 %v174, %v174
    %v273 = vmul.f32 %v175, %v175
    %v274 = vmul.f32 %v176, %v176
    %v275 = vmul.f32 %v177, %v177
    %v276 = vmul.f32 %v178, %v178
    %v277 = vmul.f32 %v179, %v179
    %v278 = vmul.f32 %v180, %v180
    %v279 = vmul.f32 %v181, %v181
    %v280 = vmul.f32 %v182, %v182
    %v281 = vadd.f32 %v239, %v240
    %v282 = vadd.f32 %v281, %v241
    %v283 = vadd.f32 %v282, %v242
    %v284 = vadd.f32 %v283, %v243
    %v285 = vadd.f32 %v284, %v244
    %286 = vadd.xlane.f32.xlu0 %v285
    %v287 = vpop.xlane.xlu0 %286
    %v288 = vadd.f32 %v245, %v246
    %v289 = vadd.f32 %v288, %v247
    %v290 = vadd.f32 %v289, %v248
    %v291 = vadd.f32 %v290, %v249
    %v292 = vadd.f32 %v291, %v250
    %293 = vadd.xlane.f32.xlu0 %v292
    %v294 = vpop.xlane.xlu0 %293
    %v295 = vadd.f32 %v251, %v252
    %v296 = vadd.f32 %v295, %v253
    %v297 = vadd.f32 %v296, %v254
    %v298 = vadd.f32 %v297, %v255
    %v299 = vadd.f32 %v298, %v256
    %300 = vadd.xlane.f32.xlu0 %v299
    %v301 = vpop.xlane.xlu0 %300
    %v302 = vadd.f32 %v257, %v258
    %v303 = vadd.f32 %v302, %v259
    %v304 = vadd.f32 %v303, %v260
    %v305 = vadd.f32 %v304, %v261
    %v306 = vadd.f32 %v305, %v262
    %307 = vadd.xlane.f32.xlu0 %v306
    %v308 = vpop.xlane.xlu0 %307
    %v309 = vadd.f32 %v263, %v264
    %v310 = vadd.f32 %v309, %v265
    %v311 = vadd.f32 %v310, %v266
    %v312 = vadd.f32 %v311, %v267
    %v313 = vadd.f32 %v312, %v268
    %314 = vadd.xlane.f32.xlu0 %v313
    %v315 = vpop.xlane.xlu0 %314
    %v316 = vadd.f32 %v269, %v270
    %v317 = vadd.f32 %v316, %v271
    %v318 = vadd.f32 %v317, %v272
    %v319 = vadd.f32 %v318, %v273
    %v320 = vadd.f32 %v319, %v274
    %321 = vadd.xlane.f32.xlu0 %v320
    %v322 = vpop.xlane.xlu0 %321
    %v323 = vadd.f32 %v275, %v276
    %v324 = vadd.f32 %v323, %v277
    %v325 = vadd.f32 %v324, %v278
    %v326 = vadd.f32 %v325, %v279
    %v327 = vadd.f32 %v326, %v280
    %328 = vadd.xlane.f32.xlu0 %v327
    %v329 = vpop.xlane.xlu0 %328
    %v330 = vmul.f32 %v287, 0.0013020834
    %v331 = vmul.f32 %v294, 0.0013020834
    %v332 = vmul.f32 %v301, 0.0013020834
    %v333 = vmul.f32 %v308, 0.0013020834
    %v334 = vmul.f32 %v315, 0.0013020834
    %v335 = vmul.f32 %v322, 0.0013020834
    %v336 = vmul.f32 %v329, 0.0013020834
    %v337 = vmul.f32 %v232, %v232
    %v338 = vmul.f32 %v233, %v233
    %v339 = vmul.f32 %v234, %v234
    %v340 = vmul.f32 %v235, %v235
    %v341 = vmul.f32 %v236, %v236
    %v342 = vmul.f32 %v237, %v237
    %v343 = vmul.f32 %v238, %v238
    %v344 = vsub.f32 %v330, %v337
    %v345 = vsub.f32 %v331, %v338
    %v346 = vsub.f32 %v332, %v339
    %v347 = vsub.f32 %v333, %v340
    %v348 = vsub.f32 %v334, %v341
    %v349 = vsub.f32 %v335, %v342
    %v350 = vsub.f32 %v336, %v343
    %v351 = vadd.f32 %v344, 1e-05
    %v352 = vadd.f32 %v345, 1e-05
    %v353 = vadd.f32 %v346, 1e-05
    %v354 = vadd.f32 %v347, 1e-05
    %v355 = vadd.f32 %v348, 1e-05
    %v356 = vadd.f32 %v349, 1e-05
    %v357 = vadd.f32 %v350, 1e-05
    %v358 = vrsqrt.pop %v351
    %v359 = vrsqrt.pop %v352
    %v360 = vrsqrt.pop %v353
    %v361 = vrsqrt.pop %v354
    %v362 = vrsqrt.pop %v355
    %v363 = vrsqrt.pop %v356
    %v364 = vrsqrt.pop %v357
    %v365 = vsub.f32 %v141, %v232
    %v366 = vsub.f32 %v142, %v232
    %v367 = vsub.f32 %v143, %v232
    %v368 = vsub.f32 %v144, %v232
    %v369 = vsub.f32 %v145, %v232
    %v370 = vsub.f32 %v146, %v232
    %v371 = vsub.f32 %v147, %v233
    %v372 = vsub.f32 %v148, %v233
    %v373 = vsub.f32 %v149, %v233
    %v374 = vsub.f32 %v150, %v233
    %v375 = vsub.f32 %v151, %v233
    %v376 = vsub.f32 %v152, %v233
    %v377 = vsub.f32 %v153, %v234
    %v378 = vsub.f32 %v154, %v234
    %v379 = vsub.f32 %v155, %v234
    %v380 = vsub.f32 %v156, %v234
    %v381 = vsub.f32 %v157, %v234
    %v382 = vsub.f32 %v158, %v234
    %v383 = vsub.f32 %v159, %v235
    %v384 = vsub.f32 %v160, %v235
    %v385 = vsub.f32 %v161, %v235
    %v386 = vsub.f32 %v162, %v235
    %v387 = vsub.f32 %v163, %v235
    %v388 = vsub.f32 %v164, %v235
    %v389 = vsub.f32 %v165, %v236
    %v390 = vsub.f32 %v166, %v236
    %v391 = vsub.f32 %v167, %v236
    %v392 = vsub.f32 %v168, %v236
    %v393 = vsub.f32 %v169, %v236
    %v394 = vsub.f32 %v170, %v236
    %v395 = vsub.f32 %v171, %v237
    %v396 = vsub.f32 %v172, %v237
    %v397 = vsub.f32 %v173, %v237
    %v398 = vsub.f32 %v174, %v237
    %v399 = vsub.f32 %v175, %v237
    %v400 = vsub.f32 %v176, %v237
    %v401 = vsub.f32 %v177, %v238
    %v402 = vsub.f32 %v178, %v238
    %v403 = vsub.f32 %v179, %v238
    %v404 = vsub.f32 %v180, %v238
    %v405 = vsub.f32 %v181, %v238
    %v406 = vsub.f32 %v182, %v238
    %v407 = vmul.f32 %v365, %v358
    %v408 = vmul.f32 %v366, %v358
    %v409 = vmul.f32 %v367, %v358
    %v410 = vmul.f32 %v368, %v358
    %v411 = vmul.f32 %v369, %v358
    %v412 = vmul.f32 %v370, %v358
    %v413 = vmul.f32 %v371, %v359
    %v414 = vmul.f32 %v372, %v359
    %v415 = vmul.f32 %v373, %v359
    %v416 = vmul.f32 %v374, %v359
    %v417 = vmul.f32 %v375, %v359
    %v418 = vmul.f32 %v376, %v359
    %v419 = vmul.f32 %v377, %v360
    %v420 = vmul.f32 %v378, %v360
    %v421 = vmul.f32 %v379, %v360
    %v422 = vmul.f32 %v380, %v360
    %v423 = vmul.f32 %v381, %v360
    %v424 = vmul.f32 %v382, %v360
    %v425 = vmul.f32 %v383, %v361
    %v426 = vmul.f32 %v384, %v361
    %v427 = vmul.f32 %v385, %v361
    %v428 = vmul.f32 %v386, %v361
    %v429 = vmul.f32 %v387, %v361
    %v430 = vmul.f32 %v388, %v361
    %v431 = vmul.f32 %v389, %v362
    %v432 = vmul.f32 %v390, %v362
    %v433 = vmul.f32 %v391, %v362
    %v434 = vmul.f32 %v392, %v362
    %v435 = vmul.f32 %v393, %v362
    %v436 = vmul.f32 %v394, %v362
    %v437 = vmul.f32 %v395, %v363
    %v438 = vmul.f32 %v396, %v363
    %v439 = vmul.f32 %v397, %v363
    %v440 = vmul.f32 %v398, %v363
    %v441 = vmul.f32 %v399, %v363
    %v442 = vmul.f32 %v400, %v363
    %v443 = vmul.f32 %v401, %v364
    %v444 = vmul.f32 %v402, %v364
    %v445 = vmul.f32 %v403, %v364
    %v446 = vmul.f32 %v404, %v364
    %v447 = vmul.f32 %v405, %v364
    %v448 = vmul.f32 %v406, %v364
    %v449 = vld [vmem:[%s2] sm:$0x3f]
    %v450 = vld [vmem:[#allocation7] sm:$0x3f]
    %v452 = vlaneseq
    %v453 = vshrl.u32 %v452, 7
    %v454 = vsub.s32 0, %v453
    %v455 = vrot.slane %v449, %v454
    %v456 = vlaneseq
    %v457 = vshrl.u32 %v456, 7
    %v458 = vsub.s32 1, %v457
    %v459 = vrot.slane %v449, %v458
    %v460 = vlaneseq
    %v461 = vshrl.u32 %v460, 7
    %v462 = vsub.s32 2, %v461
    %v463 = vrot.slane %v449, %v462
    %v464 = vlaneseq
    %v465 = vshrl.u32 %v464, 7
    %v466 = vsub.s32 3, %v465
    %v467 = vrot.slane %v449, %v466
    %v468 = vlaneseq
    %v469 = vshrl.u32 %v468, 7
    %v470 = vsub.s32 4, %v469
    %v471 = vrot.slane %v449, %v470
    %v472 = vlaneseq
    %v473 = vshrl.u32 %v472, 7
    %v474 = vsub.s32 5, %v473
    %v475 = vrot.slane %v449, %v474
    %v482 = vmul.f32 %v407, %v455
    %v483 = vmul.f32 %v408, %v459
    %v484 = vmul.f32 %v409, %v463
    %v485 = vmul.f32 %v410, %v467
    %v486 = vmul.f32 %v411, %v471
    %v487 = vmul.f32 %v412, %v475
    %v488 = vmul.f32 %v413, %v455
    %v489 = vmul.f32 %v414, %v459
    %v490 = vmul.f32 %v415, %v463
    %v491 = vmul.f32 %v416, %v467
    %v492 = vmul.f32 %v417, %v471
    %v493 = vmul.f32 %v418, %v475
    %v494 = vmul.f32 %v419, %v455
    %v495 = vmul.f32 %v420, %v459
    %v496 = vmul.f32 %v421, %v463
    %v497 = vmul.f32 %v422, %v467
    %v498 = vmul.f32 %v423, %v471
    %v499 = vmul.f32 %v424, %v475
    %v500 = vmul.f32 %v425, %v455
    %v501 = vmul.f32 %v426, %v459
    %v502 = vmul.f32 %v427, %v463
    %v503 = vmul.f32 %v428, %v467
    %v504 = vmul.f32 %v429, %v471
    %v505 = vmul.f32 %v430, %v475
    %v506 = vmul.f32 %v431, %v455
    %v507 = vmul.f32 %v432, %v459
    %v508 = vmul.f32 %v433, %v463
    %v509 = vmul.f32 %v434, %v467
    %v510 = vmul.f32 %v435, %v471
    %v511 = vmul.f32 %v436, %v475
    %v512 = vmul.f32 %v437, %v455
    %v513 = vmul.f32 %v438, %v459
    %v514 = vmul.f32 %v439, %v463
    %v515 = vmul.f32 %v440, %v467
    %v516 = vmul.f32 %v441, %v471
    %v517 = vmul.f32 %v442, %v475
    %v518 = vmul.f32 %v443, %v455
    %v519 = vmul.f32 %v444, %v459
    %v520 = vmul.f32 %v445, %v463
    %v521 = vmul.f32 %v446, %v467
    %v522 = vmul.f32 %v447, %v471
    %v523 = vmul.f32 %v448, %v475
    %v525 = vlaneseq
    %v526 = vshrl.u32 %v525, 7
    %v527 = vsub.s32 0, %v526
    %v528 = vrot.slane %v450, %v527
    %v529 = vlaneseq
    %v530 = vshrl.u32 %v529, 7
    %v531 = vsub.s32 1, %v530
    %v532 = vrot.slane %v450, %v531
    %v533 = vlaneseq
    %v534 = vshrl.u32 %v533, 7
    %v535 = vsub.s32 2, %v534
    %v536 = vrot.slane %v450, %v535
    %v537 = vlaneseq
    %v538 = vshrl.u32 %v537, 7
    %v539 = vsub.s32 3, %v538
    %v540 = vrot.slane %v450, %v539
    %v541 = vlaneseq
    %v542 = vshrl.u32 %v541, 7
    %v543 = vsub.s32 4, %v542
    %v544 = vrot.slane %v450, %v543
    %v545 = vlaneseq
    %v546 = vshrl.u32 %v545, 7
    %v547 = vsub.s32 5, %v546
    %v548 = vrot.slane %v450, %v547
    %v555 = vadd.f32 %v482, %v528
    %v556 = vadd.f32 %v483, %v532
    %v557 = vadd.f32 %v484, %v536
    %v558 = vadd.f32 %v485, %v540
    %v559 = vadd.f32 %v486, %v544
    %v560 = vadd.f32 %v487, %v548
    %v561 = vadd.f32 %v488, %v528
    %v562 = vadd.f32 %v489, %v532
    %v563 = vadd.f32 %v490, %v536
    %v564 = vadd.f32 %v491, %v540
    %v565 = vadd.f32 %v492, %v544
    %v566 = vadd.f32 %v493, %v548
    %v567 = vadd.f32 %v494, %v528
    %v568 = vadd.f32 %v495, %v532
    %v569 = vadd.f32 %v496, %v536
    %v570 = vadd.f32 %v497, %v540
    %v571 = vadd.f32 %v498, %v544
    %v572 = vadd.f32 %v499, %v548
    %v573 = vadd.f32 %v500, %v528
    %v574 = vadd.f32 %v501, %v532
    %v575 = vadd.f32 %v502, %v536
    %v576 = vadd.f32 %v503, %v540
    %v577 = vadd.f32 %v504, %v544
    %v578 = vadd.f32 %v505, %v548
    %v579 = vadd.f32 %v506, %v528
    %v580 = vadd.f32 %v507, %v532
    %v581 = vadd.f32 %v508, %v536
    %v582 = vadd.f32 %v509, %v540
    %v583 = vadd.f32 %v510, %v544
    %v584 = vadd.f32 %v511, %v548
    %v585 = vadd.f32 %v512, %v528
    %v586 = vadd.f32 %v513, %v532
    %v587 = vadd.f32 %v514, %v536
    %v588 = vadd.f32 %v515, %v540
    %v589 = vadd.f32 %v516, %v544
    %v590 = vadd.f32 %v517, %v548
    %v591 = vadd.f32 %v518, %v528
    %v592 = vadd.f32 %v519, %v532
    %v593 = vadd.f32 %v520, %v536
    %v594 = vadd.f32 %v521, %v540
    %v595 = vadd.f32 %v522, %v544
    %v596 = vadd.f32 %v523, %v548
    %597 = vst [vmem:[#allocation8] sm:$0xff] %v555
    %598 = vst [vmem:[#allocation8 + $0x8] sm:$0xff] %v556
    %599 = vst [vmem:[#allocation8 + $0x10] sm:$0xff] %v557
    %600 = vst [vmem:[#allocation8 + $0x18] sm:$0xff] %v558
    %601 = vst [vmem:[#allocation8 + $0x20] sm:$0xff] %v559
    %602 = vst [vmem:[#allocation8 + $0x28] sm:$0xff] %v560
    %603 = vst [vmem:[#allocation8 + $0x30] sm:$0xff] %v561
    %604 = vst [vmem:[#allocation8 + $0x38] sm:$0xff] %v562
    %605 = vst [vmem:[#allocation8 + $0x40] sm:$0xff] %v563
    %606 = vst [vmem:[#allocation8 + $0x48] sm:$0xff] %v564
    %607 = vst [vmem:[#allocation8 + $0x50] sm:$0xff] %v565
    %608 = vst [vmem:[#allocation8 + $0x58] sm:$0xff] %v566
    %609 = vst [vmem:[#allocation8 + $0x60] sm:$0xff] %v567
    %610 = vst [vmem:[#allocation8 + $0x68] sm:$0xff] %v568
    %611 = vst [vmem:[#allocation8 + $0x70] sm:$0xff] %v569
    %612 = vst [vmem:[#allocation8 + $0x78] sm:$0xff] %v570
    %613 = vst [vmem:[#allocation8 + $0x80] sm:$0xff] %v571
    %614 = vst [vmem:[#allocation8 + $0x88] sm:$0xff] %v572
    %615 = vst [vmem:[#allocation8 + $0x90] sm:$0xff] %v573
    %616 = vst [vmem:[#allocation8 + $0x98] sm:$0xff] %v574
    %617 = vst [vmem:[#allocation8 + $0xa0] sm:$0xff] %v575
    %618 = vst [vmem:[#allocation8 + $0xa8] sm:$0xff] %v576
    %619 = vst [vmem:[#allocation8 + $0xb0] sm:$0xff] %v577
    %620 = vst [vmem:[#allocation8 + $0xb8] sm:$0xff] %v578
    %621 = vst [vmem:[#allocation8 + $0xc0] sm:$0xff] %v579
    %622 = vst [vmem:[#allocation8 + $0xc8] sm:$0xff] %v580
    %623 = vst [vmem:[#allocation8 + $0xd0] sm:$0xff] %v581
    %624 = vst [vmem:[#allocation8 + $0xd8] sm:$0xff] %v582
    %625 = vst [vmem:[#allocation8 + $0xe0] sm:$0xff] %v583
    %626 = vst [vmem:[#allocation8 + $0xe8] sm:$0xff] %v584
    %627 = vst [vmem:[#allocation8 + $0xf0] sm:$0xff] %v585
    %628 = vst [vmem:[#allocation8 + $0xf8] sm:$0xff] %v586
    %629 = vst [vmem:[#allocation8 + $0x100] sm:$0xff] %v587
    %630 = vst [vmem:[#allocation8 + $0x108] sm:$0xff] %v588
    %631 = vst [vmem:[#allocation8 + $0x110] sm:$0xff] %v589
    %632 = vst [vmem:[#allocation8 + $0x118] sm:$0xff] %v590
    %633 = vst [vmem:[#allocation8 + $0x120] sm:$0xff] %v591
    %634 = vst [vmem:[#allocation8 + $0x128] sm:$0xff] %v592
    %635 = vst [vmem:[#allocation8 + $0x130] sm:$0xff] %v593
    %636 = vst [vmem:[#allocation8 + $0x138] sm:$0xff] %v594
    %637 = vst [vmem:[#allocation8 + $0x140] sm:$0xff] %v595
    %638 = vst [vmem:[#allocation8 + $0x148] sm:$0xff] %v596
    // Predicated region
    $region30: #{tpu_custom_call.1} parent=1 // pred_check
      _
    $region31: #{tpu_custom_call.1} parent=1 // pred_check_branch
      %640 = sbr.rel (0) target = $region33
    $region32: #{tpu_custom_call.1} parent=1 // pred_region
      %s642 = ssub.s32 5376, 5376
      %643 = vsyncadd [#allocation4], %s642
      %s644 = sshll.u32 [#allocation8], 4
      %s645 = int_to_ptr.vmem [resolvable:$true] %s644
      %650 = dma.vmem_to_hbm [thread:$0]  %s645, 5376, %s4, [#allocation4], 768, 768, 48
    $region33: #{tpu_custom_call.1} parent=1 // pred_fallthru
      _
    // Predicated region
    $region34: #{tpu_custom_call.1} parent=1 // pred_check
      _
    $region35: #{tpu_custom_call.1} parent=1 // pred_check_branch
      %652 = sbr.rel (0) target = $region37
    $region36: #{tpu_custom_call.1} parent=1 // pred_region
      %653 = dma.done [#allocation4], 5376
    $region37: #{tpu_custom_call.1} parent=1 // pred_fallthru
      _
    %654 = vsyncpa [#allocation3], 1
    %655 = vsyncpa [#allocation6], 1
    %656 = vsyncpa [#allocation4], 1

</llo_original>
